<compile_context>
chip_gen: v5e
topology: v5e:2x2
jax: 0.10.0
libtpu: 0.0.40
codegen_flags: <defaults>
</compile_context>

<pallas_src>
import math
import functools

import jax
import jax.numpy as jnp
from jax import lax
from jax.experimental import pallas as pl
from jax.experimental.pallas import tpu as pltpu

D_MODEL = 64
NUM_HEADS = 4
HEAD_SIZE = D_MODEL // NUM_HEADS          # 16
CONTEXT_LENGTH = 16
NEG_BIG = -1e30                           # finite mask fill (no inf arithmetic)


def mha_kernel(x_ref, w_ref, bp_ref, o_ref):
    # x_ref:  (Bt, T, C)          block of Bt batch elements
    # w_ref:  (C, 2*C + H*C)      fused [Qh0..Qh3 | Kh0..Kh3 | V'h0..V'h3] weights
    #                             (Q pre-scaled by 1/sqrt(hs); V'_h = Wv_h @ Wp_h)
    # bp_ref: (1, C)              output projection bias
    # o_ref:  (Bt, T, C)
    Bt, T, C = x_ref.shape
    M = Bt * T

    # Flatten batch*time -> M rows; one fused matmul (M, 64) @ (64, 384).
    x2d = x_ref[...].reshape(M, C).astype(jnp.float32)
    qkv = jnp.dot(x2d, w_ref[...], preferred_element_type=jnp.float32)   # (M, 384)

    # Additive causal bias, computed + broadcast once per block (hoisted out of loop).
    row = lax.broadcasted_iota(jnp.int32, (T, T), 0)
    col = lax.broadcasted_iota(jnp.int32, (T, T), 1)
    causal_bias = jnp.where(col <= row, 0.0, NEG_BIG).astype(jnp.float32)   # (T, T)
    causal_bias = jnp.broadcast_to(causal_bias, (Bt, T, T))                 # (Bt, T, T)

    acc = None
    for h in range(NUM_HEADS):                            # static unroll over 4 heads
        q = qkv[:, h * HEAD_SIZE:(h + 1) * HEAD_SIZE].reshape(Bt, T, HEAD_SIZE)
        k = qkv[:, C + h * HEAD_SIZE:C + (h + 1) * HEAD_SIZE].reshape(Bt, T, HEAD_SIZE)
        vp = qkv[:, 2 * C + h * C:2 * C + (h + 1) * C].reshape(Bt, T, C)   # V'_h

        # scores (scale already folded into Wq) + causal bias
        s = jnp.einsum('bqd,bkd->bqk', q, k,
                       preferred_element_type=jnp.float32) + causal_bias   # (Bt, T, T)

        # numerically-stable softmax along keys (denominator via EUP vrcp)
        m = jnp.max(s, axis=-1, keepdims=True)
        e = jnp.exp(s - m)
        p = e * pl.reciprocal(jnp.sum(e, axis=-1, keepdims=True), approx=True)

        # TODO(synk): attention-weight dropout omitted (inference / eval mode).
        # P_h @ V'_h already lands in the full 64-wide output space -> just accumulate.
        contrib = jnp.einsum('bqk,bkd->bqd', p, vp,
                             preferred_element_type=jnp.float32)           # (Bt, T, C)
        acc = contrib if acc is None else acc + contrib

    out = acc + bp_ref[...].astype(jnp.float32)            # (Bt,T,C) + (1,C) broadcast
    # TODO(synk): output dropout omitted (inference / eval mode).
    o_ref[...] = out.astype(o_ref.dtype)


@functools.partial(jax.jit, static_argnames=("block_b",))
def multi_head_attention(x, wq, wk, wv, wp, bp, block_b=128):
    B, T, C = x.shape
    assert C == D_MODEL and T <= CONTEXT_LENGTH
    scale = 1.0 / math.sqrt(HEAD_SIZE)

    # --- one-time weight preprocessing (tiny XLA ops, outside the kernel) ---
    def flat(w):  # (H, C, hs) -> (C, H*hs), head-major so per-head lane slices are static
        return jnp.transpose(w, (1, 0, 2)).reshape(C, NUM_HEADS * HEAD_SIZE)

    wq_f = flat(wq * scale)                                   # fold 1/sqrt(hs) into Q
    wk_f = flat(wk)
    # Fold the output projection into the value projection, per head:
    #   concat_h(P_h V_h) @ Wp == sum_h P_h (x @ (Wv_h @ Wp[h*hs:(h+1)*hs, :]))
    wp_heads = wp.reshape(NUM_HEADS, HEAD_SIZE, D_MODEL)       # (H, hs, C)
    wvp = jnp.einsum('hcd,hdf->chf', wv, wp_heads).reshape(C, NUM_HEADS * D_MODEL)
    w_fused = jnp.concatenate([wq_f, wk_f, wvp], axis=-1)      # (64, 64+64+256 = 384)

    # --- batch many examples per grid step; pad B up to a multiple of the block ---
    bt = min(B, block_b)
    nb = pl.cdiv(B, bt)
    b_pad = nb * bt
    x_p = x if b_pad == B else jnp.pad(x, ((0, b_pad - B), (0, 0), (0, 0)))

    out = pl.pallas_call(
        mha_kernel,
        out_shape=jax.ShapeDtypeStruct((b_pad, T, C), x.dtype),
        grid_spec=pltpu.PrefetchScalarGridSpec(
            num_scalar_prefetch=0,
            grid=(nb,),
            in_specs=[
                pl.BlockSpec((bt, T, C), lambda b: (b, 0, 0)),            # x block
                pl.BlockSpec((C, 2 * C + NUM_HEADS * C), lambda b: (0, 0)),  # fused W
                pl.BlockSpec((1, C), lambda b: (0, 0)),                   # bias
            ],
            out_specs=pl.BlockSpec((bt, T, C), lambda b: (b, 0, 0)),
        ),
        compiler_params=pltpu.CompilerParams(dimension_semantics=("parallel",)),
    )(x_p, w_fused, bp)
    return out[:B]


def reference(x, wq, wk, wv, wp, bp):
    """Pure-JAX reference mirroring the PyTorch forward (dropout = identity)."""
    B, T, C = x.shape
    mask = jnp.tril(jnp.ones((T, T), dtype=bool))
    outs = []
    for h in range(NUM_HEADS):
        q = x @ wq[h]
        k = x @ wk[h]
        v = x @ wv[h]
        s = (q @ jnp.swapaxes(k, -1, -2)) * (1.0 / math.sqrt(HEAD_SIZE))
        s = jnp.where(mask, s, -jnp.inf)
        p = jax.nn.softmax(s, axis=-1)
        outs.append(p @ v)
    cat = jnp.concatenate(outs, axis=-1)
    return cat @ wp + bp


if __name__ == "__main__":
    key = jax.random.PRNGKey(0)
    kx, kq, kk, kv, kp, kb = jax.random.split(key, 6)

    B, T = 2, 8
    x = jax.random.normal(kx, (B, T, D_MODEL), dtype=jnp.float32)

    # Deterministic parameter init (scaled like PyTorch's default uniform range).
    bound = 1.0 / math.sqrt(D_MODEL)
    wq = jax.random.uniform(kq, (NUM_HEADS, D_MODEL, HEAD_SIZE), jnp.float32, -bound, bound)
    wk = jax.random.uniform(kk, (NUM_HEADS, D_MODEL, HEAD_SIZE), jnp.float32, -bound, bound)
    wv = jax.random.uniform(kv, (NUM_HEADS, D_MODEL, HEAD_SIZE), jnp.float32, -bound, bound)
    wp = jax.random.uniform(kp, (D_MODEL, D_MODEL), jnp.float32, -bound, bound)
    bp = jax.random.uniform(kb, (1, D_MODEL), jnp.float32, -bound, bound)

    out = multi_head_attention(x, wq, wk, wv, wp, bp)
    out = jax.block_until_ready(out)

    ref = reference(x, wq, wk, wv, wp, bp)
    assert out.shape == (B, T, D_MODEL)
    # slightly looser tolerance: approx (EUP) reciprocal in the softmax denominator
    assert jnp.allclose(out, ref, atol=5e-3, rtol=5e-3), "mismatch vs JAX reference"

    print("KERNEL_OK")
</pallas_src>

<mosaic_0001>
module attributes {stable_mosaic.version = 11 : i64} {
  func.func @mha_kernel(%arg0: i32, %arg1: memref<2x8x64xf32, #tpu.memory_space<vmem>>, %arg2: memref<64x384xf32, #tpu.memory_space<vmem>>, %arg3: memref<1x64xf32, #tpu.memory_space<vmem>>, %arg4: memref<2x8x64xf32, #tpu.memory_space<vmem>>) attributes {dimension_semantics = [#tpu.dimension_semantics<parallel>], iteration_bounds = array<i64: 1>, scalar_prefetch = 0 : i64, scratch_operands = 0 : i64, tpu.core_type = #tpu.core_type<tc>, window_params = [{transform_indices = @transform_0, window_bounds = array<i64: 2, 8, 64>}, {pipeline_mode = #tpu.pipeline_mode<synchronous>, transform_indices = @transform_1, window_bounds = array<i64: 64, 384>}, {pipeline_mode = #tpu.pipeline_mode<synchronous>, transform_indices = @transform_2, window_bounds = array<i64: 1, 64>}, {transform_indices = @transform_3, window_bounds = array<i64: 2, 8, 64>}]} {
    %c0 = arith.constant 0 : index
    %c0_0 = arith.constant 0 : index
    %c0_1 = arith.constant 0 : index
    %0 = vector.load %arg1[%c0, %c0_0, %c0_1] : memref<2x8x64xf32, #tpu.memory_space<vmem>>, vector<2x8x64xf32>
    %1 = vector.shape_cast %0 : vector<2x8x64xf32> to vector<16x64xf32>
    %c0_2 = arith.constant 0 : index
    %c0_3 = arith.constant 0 : index
    %2 = vector.load %arg2[%c0_2, %c0_3] : memref<64x384xf32, #tpu.memory_space<vmem>>, vector<64x384xf32>
    %cst = arith.constant dense<0.000000e+00> : vector<16x384xf32>
    %3 = tpu.matmul %1, %2, %cst {dimension_numbers = #tpu.dot_dimension_numbers<[1], [0], [0], [1], [0, 0, 1, 1], [], []>} : vector<16x64xf32>, vector<64x384xf32>, vector<16x384xf32> -> vector<16x384xf32>
    %4 = tpu.iota {dimensions = array<i32: 0>} : vector<8x8xi32>
    %5 = tpu.iota {dimensions = array<i32: 1>} : vector<8x8xi32>
    %6 = arith.cmpi sle, %5, %4 : vector<8x8xi32>
    %cst_4 = arith.constant 0.000000e+00 : f32
    %cst_5 = arith.constant -1.000000e+30 : f32
    %7 = vector.broadcast %cst_4 : f32 to vector<8x8xf32>
    %8 = vector.broadcast %cst_5 : f32 to vector<8x8xf32>
    %9 = arith.select %6, %7, %8 : vector<8x8xi1>, vector<8x8xf32>
    %10 = vector.shape_cast %9 : vector<8x8xf32> to vector<1x8x8xf32>
    %11 = vector.broadcast %10 : vector<1x8x8xf32> to vector<2x8x8xf32>
    %12 = vector.extract_strided_slice %3 {offsets = [0, 0], sizes = [16, 16], strides = [1, 1]} : vector<16x384xf32> to vector<16x16xf32>
    %13 = vector.shape_cast %12 : vector<16x16xf32> to vector<2x8x16xf32>
    %14 = vector.extract_strided_slice %3 {offsets = [0, 64], sizes = [16, 16], strides = [1, 1]} : vector<16x384xf32> to vector<16x16xf32>
    %15 = vector.shape_cast %14 : vector<16x16xf32> to vector<2x8x16xf32>
    %16 = vector.extract_strided_slice %3 {offsets = [0, 128], sizes = [16, 64], strides = [1, 1]} : vector<16x384xf32> to vector<16x64xf32>
    %17 = vector.shape_cast %16 : vector<16x64xf32> to vector<2x8x64xf32>
    "tpu.trace_start"() <{level = 10 : i32, message = "bqd,bkd->bqk"}> : () -> ()
    %cst_6 = arith.constant dense<0.000000e+00> : vector<2x8x8xf32>
    %18 = tpu.matmul %13, %15, %cst_6 {dimension_numbers = #tpu.dot_dimension_numbers<[2], [2], [1], [1], [0, 0, 0, 1, 1, 1], [0], [0]>} : vector<2x8x16xf32>, vector<2x8x16xf32>, vector<2x8x8xf32> -> vector<2x8x8xf32>
    "tpu.trace_stop"() : () -> ()
    %19 = arith.addf %18, %11 : vector<2x8x8xf32>
    %cst_7 = arith.constant dense<0xFF800000> : vector<2x8xf32>
    %20 = vector.multi_reduction <maximumf>, %19, %cst_7 [2] : vector<2x8x8xf32> to vector<2x8xf32>
    %21 = vector.shape_cast %20 : vector<2x8xf32> to vector<2x8x1xf32>
    %22 = vector.broadcast %21 : vector<2x8x1xf32> to vector<2x8x8xf32>
    %23 = arith.subf %19, %22 : vector<2x8x8xf32>
    %24 = math.exp %23 : vector<2x8x8xf32>
    %cst_8 = arith.constant dense<0.000000e+00> : vector<2x8xf32>
    %25 = vector.multi_reduction <add>, %24, %cst_8 [2] : vector<2x8x8xf32> to vector<2x8xf32>
    %26 = vector.shape_cast %25 : vector<2x8xf32> to vector<2x8x1xf32>
    %27 = tpu.reciprocal %26 {approx = true} : vector<2x8x1xf32> -> vector<2x8x1xf32>
    %28 = vector.broadcast %27 : vector<2x8x1xf32> to vector<2x8x8xf32>
    %29 = arith.mulf %24, %28 : vector<2x8x8xf32>
    "tpu.trace_start"() <{level = 10 : i32, message = "bqk,bkd->bqd"}> : () -> ()
    %cst_9 = arith.constant dense<0.000000e+00> : vector<2x8x64xf32>
    %30 = tpu.matmul %29, %17, %cst_9 {dimension_numbers = #tpu.dot_dimension_numbers<[2], [1], [1], [2], [0, 0, 0, 1, 1, 2], [0], [0]>} : vector<2x8x8xf32>, vector<2x8x64xf32>, vector<2x8x64xf32> -> vector<2x8x64xf32>
    "tpu.trace_stop"() : () -> ()
    %31 = vector.extract_strided_slice %3 {offsets = [0, 16], sizes = [16, 16], strides = [1, 1]} : vector<16x384xf32> to vector<16x16xf32>
    %32 = vector.shape_cast %31 : vector<16x16xf32> to vector<2x8x16xf32>
    %33 = vector.extract_strided_slice %3 {offsets = [0, 80], sizes = [16, 16], strides = [1, 1]} : vector<16x384xf32> to vector<16x16xf32>
    %34 = vector.shape_cast %33 : vector<16x16xf32> to vector<2x8x16xf32>
    %35 = vector.extract_strided_slice %3 {offsets = [0, 192], sizes = [16, 64], strides = [1, 1]} : vector<16x384xf32> to vector<16x64xf32>
    %36 = vector.shape_cast %35 : vector<16x64xf32> to vector<2x8x64xf32>
    "tpu.trace_start"() <{level = 10 : i32, message = "bqd,bkd->bqk"}> : () -> ()
    %cst_10 = arith.constant dense<0.000000e+00> : vector<2x8x8xf32>
    %37 = tpu.matmul %32, %34, %cst_10 {dimension_numbers = #tpu.dot_dimension_numbers<[2], [2], [1], [1], [0, 0, 0, 1, 1, 1], [0], [0]>} : vector<2x8x16xf32>, vector<2x8x16xf32>, vector<2x8x8xf32> -> vector<2x8x8xf32>
    "tpu.trace_stop"() : () -> ()
    %38 = arith.addf %37, %11 : vector<2x8x8xf32>
    %cst_11 = arith.constant dense<0xFF800000> : vector<2x8xf32>
    %39 = vector.multi_reduction <maximumf>, %38, %cst_11 [2] : vector<2x8x8xf32> to vector<2x8xf32>
    %40 = vector.shape_cast %39 : vector<2x8xf32> to vector<2x8x1xf32>
    %41 = vector.broadcast %40 : vector<2x8x1xf32> to vector<2x8x8xf32>
    %42 = arith.subf %38, %41 : vector<2x8x8xf32>
    %43 = math.exp %42 : vector<2x8x8xf32>
    %cst_12 = arith.constant dense<0.000000e+00> : vector<2x8xf32>
    %44 = vector.multi_reduction <add>, %43, %cst_12 [2] : vector<2x8x8xf32> to vector<2x8xf32>
    %45 = vector.shape_cast %44 : vector<2x8xf32> to vector<2x8x1xf32>
    %46 = tpu.reciprocal %45 {approx = true} : vector<2x8x1xf32> -> vector<2x8x1xf32>
    %47 = vector.broadcast %46 : vector<2x8x1xf32> to vector<2x8x8xf32>
    %48 = arith.mulf %43, %47 : vector<2x8x8xf32>
    "tpu.trace_start"() <{level = 10 : i32, message = "bqk,bkd->bqd"}> : () -> ()
    %cst_13 = arith.constant dense<0.000000e+00> : vector<2x8x64xf32>
    %49 = tpu.matmul %48, %36, %cst_13 {dimension_numbers = #tpu.dot_dimension_numbers<[2], [1], [1], [2], [0, 0, 0, 1, 1, 2], [0], [0]>} : vector<2x8x8xf32>, vector<2x8x64xf32>, vector<2x8x64xf32> -> vector<2x8x64xf32>
    "tpu.trace_stop"() : () -> ()
    %50 = arith.addf %30, %49 : vector<2x8x64xf32>
    %51 = vector.extract_strided_slice %3 {offsets = [0, 32], sizes = [16, 16], strides = [1, 1]} : vector<16x384xf32> to vector<16x16xf32>
    %52 = vector.shape_cast %51 : vector<16x16xf32> to vector<2x8x16xf32>
    %53 = vector.extract_strided_slice %3 {offsets = [0, 96], sizes = [16, 16], strides = [1, 1]} : vector<16x384xf32> to vector<16x16xf32>
    %54 = vector.shape_cast %53 : vector<16x16xf32> to vector<2x8x16xf32>
    %55 = vector.extract_strided_slice %3 {offsets = [0, 256], sizes = [16, 64], strides = [1, 1]} : vector<16x384xf32> to vector<16x64xf32>
    %56 = vector.shape_cast %55 : vector<16x64xf32> to vector<2x8x64xf32>
    "tpu.trace_start"() <{level = 10 : i32, message = "bqd,bkd->bqk"}> : () -> ()
    %cst_14 = arith.constant dense<0.000000e+00> : vector<2x8x8xf32>
    %57 = tpu.matmul %52, %54, %cst_14 {dimension_numbers = #tpu.dot_dimension_numbers<[2], [2], [1], [1], [0, 0, 0, 1, 1, 1], [0], [0]>} : vector<2x8x16xf32>, vector<2x8x16xf32>, vector<2x8x8xf32> -> vector<2x8x8xf32>
    "tpu.trace_stop"() : () -> ()
    %58 = arith.addf %57, %11 : vector<2x8x8xf32>
    %cst_15 = arith.constant dense<0xFF800000> : vector<2x8xf32>
    %59 = vector.multi_reduction <maximumf>, %58, %cst_15 [2] : vector<2x8x8xf32> to vector<2x8xf32>
    %60 = vector.shape_cast %59 : vector<2x8xf32> to vector<2x8x1xf32>
    %61 = vector.broadcast %60 : vector<2x8x1xf32> to vector<2x8x8xf32>
    %62 = arith.subf %58, %61 : vector<2x8x8xf32>
    %63 = math.exp %62 : vector<2x8x8xf32>
    %cst_16 = arith.constant dense<0.000000e+00> : vector<2x8xf32>
    %64 = vector.multi_reduction <add>, %63, %cst_16 [2] : vector<2x8x8xf32> to vector<2x8xf32>
    %65 = vector.shape_cast %64 : vector<2x8xf32> to vector<2x8x1xf32>
    %66 = tpu.reciprocal %65 {approx = true} : vector<2x8x1xf32> -> vector<2x8x1xf32>
    %67 = vector.broadcast %66 : vector<2x8x1xf32> to vector<2x8x8xf32>
    %68 = arith.mulf %63, %67 : vector<2x8x8xf32>
    "tpu.trace_start"() <{level = 10 : i32, message = "bqk,bkd->bqd"}> : () -> ()
    %cst_17 = arith.constant dense<0.000000e+00> : vector<2x8x64xf32>
    %69 = tpu.matmul %68, %56, %cst_17 {dimension_numbers = #tpu.dot_dimension_numbers<[2], [1], [1], [2], [0, 0, 0, 1, 1, 2], [0], [0]>} : vector<2x8x8xf32>, vector<2x8x64xf32>, vector<2x8x64xf32> -> vector<2x8x64xf32>
    "tpu.trace_stop"() : () -> ()
    %70 = arith.addf %50, %69 : vector<2x8x64xf32>
    %71 = vector.extract_strided_slice %3 {offsets = [0, 48], sizes = [16, 16], strides = [1, 1]} : vector<16x384xf32> to vector<16x16xf32>
    %72 = vector.shape_cast %71 : vector<16x16xf32> to vector<2x8x16xf32>
    %73 = vector.extract_strided_slice %3 {offsets = [0, 112], sizes = [16, 16], strides = [1, 1]} : vector<16x384xf32> to vector<16x16xf32>
    %74 = vector.shape_cast %73 : vector<16x16xf32> to vector<2x8x16xf32>
    %75 = vector.extract_strided_slice %3 {offsets = [0, 320], sizes = [16, 64], strides = [1, 1]} : vector<16x384xf32> to vector<16x64xf32>
    %76 = vector.shape_cast %75 : vector<16x64xf32> to vector<2x8x64xf32>
    "tpu.trace_start"() <{level = 10 : i32, message = "bqd,bkd->bqk"}> : () -> ()
    %cst_18 = arith.constant dense<0.000000e+00> : vector<2x8x8xf32>
    %77 = tpu.matmul %72, %74, %cst_18 {dimension_numbers = #tpu.dot_dimension_numbers<[2], [2], [1], [1], [0, 0, 0, 1, 1, 1], [0], [0]>} : vector<2x8x16xf32>, vector<2x8x16xf32>, vector<2x8x8xf32> -> vector<2x8x8xf32>
    "tpu.trace_stop"() : () -> ()
    %78 = arith.addf %77, %11 : vector<2x8x8xf32>
    %cst_19 = arith.constant dense<0xFF800000> : vector<2x8xf32>
    %79 = vector.multi_reduction <maximumf>, %78, %cst_19 [2] : vector<2x8x8xf32> to vector<2x8xf32>
    %80 = vector.shape_cast %79 : vector<2x8xf32> to vector<2x8x1xf32>
    %81 = vector.broadcast %80 : vector<2x8x1xf32> to vector<2x8x8xf32>
    %82 = arith.subf %78, %81 : vector<2x8x8xf32>
    %83 = math.exp %82 : vector<2x8x8xf32>
    %cst_20 = arith.constant dense<0.000000e+00> : vector<2x8xf32>
    %84 = vector.multi_reduction <add>, %83, %cst_20 [2] : vector<2x8x8xf32> to vector<2x8xf32>
    %85 = vector.shape_cast %84 : vector<2x8xf32> to vector<2x8x1xf32>
    %86 = tpu.reciprocal %85 {approx = true} : vector<2x8x1xf32> -> vector<2x8x1xf32>
    %87 = vector.broadcast %86 : vector<2x8x1xf32> to vector<2x8x8xf32>
    %88 = arith.mulf %83, %87 : vector<2x8x8xf32>
    "tpu.trace_start"() <{level = 10 : i32, message = "bqk,bkd->bqd"}> : () -> ()
    %cst_21 = arith.constant dense<0.000000e+00> : vector<2x8x64xf32>
    %89 = tpu.matmul %88, %76, %cst_21 {dimension_numbers = #tpu.dot_dimension_numbers<[2], [1], [1], [2], [0, 0, 0, 1, 1, 2], [0], [0]>} : vector<2x8x8xf32>, vector<2x8x64xf32>, vector<2x8x64xf32> -> vector<2x8x64xf32>
    "tpu.trace_stop"() : () -> ()
    %90 = arith.addf %70, %89 : vector<2x8x64xf32>
    %c0_22 = arith.constant 0 : index
    %c0_23 = arith.constant 0 : index
    %91 = vector.load %arg3[%c0_22, %c0_23] : memref<1x64xf32, #tpu.memory_space<vmem>>, vector<1x64xf32>
    %92 = vector.shape_cast %91 : vector<1x64xf32> to vector<1x1x64xf32>
    %93 = vector.broadcast %92 : vector<1x1x64xf32> to vector<2x8x64xf32>
    %94 = arith.addf %90, %93 : vector<2x8x64xf32>
    %c0_24 = arith.constant 0 : index
    %c0_25 = arith.constant 0 : index
    %c0_26 = arith.constant 0 : index
    %95 = vector.load %arg4[%c0_24, %c0_25, %c0_26] : memref<2x8x64xf32, #tpu.memory_space<vmem>>, vector<2x8x64xf32>
    tpu.vector_store %arg4[%c0_24, %c0_25, %c0_26], %94 {strides = array<i32>} : memref<2x8x64xf32, #tpu.memory_space<vmem>>, vector<2x8x64xf32>,
    return
  }
  func.func @transform_0(%arg0: i32) -> (i32, i32, i32) {
    %c0_i32 = arith.constant 0 : i32
    %c0_i32_0 = arith.constant 0 : i32
    %c0_i32_1 = arith.constant 0 : i32
    return %arg0, %c0_i32, %c0_i32_0 : i32, i32, i32
  }
  func.func @transform_1(%arg0: i32) -> (i32, i32) {
    %c0_i32 = arith.constant 0 : i32
    %c0_i32_0 = arith.constant 0 : i32
    %c0_i32_1 = arith.constant 0 : i32
    return %c0_i32, %c0_i32_0 : i32, i32
  }
  func.func @transform_2(%arg0: i32) -> (i32, i32) {
    %c0_i32 = arith.constant 0 : i32
    %c0_i32_0 = arith.constant 0 : i32
    %c0_i32_1 = arith.constant 0 : i32
    return %c0_i32, %c0_i32_0 : i32, i32
  }
  func.func @transform_3(%arg0: i32) -> (i32, i32, i32) {
    %c0_i32 = arith.constant 0 : i32
    %c0_i32_0 = arith.constant 0 : i32
    %c0_i32_1 = arith.constant 0 : i32
    return %arg0, %c0_i32, %c0_i32_0 : i32, i32, i32
  }
}

</mosaic_0001>

<llo_original>
// kernel: multi_head_attention.1
$region0: #{multi_head_attention.1}
  #allocation0 [shape = 'u32[]', space=smem, size = 0x4, offset = 0x4, fixed_abs, tag = 'smem constant byte address 0x4 - core index']
  #allocation1 [shape = 'u32[72,128]{1,0:T(1,128)}', space=vmem, size = 0x9000, scoped, tag = 'internal scratch']
  %s0 = inlined_call_operand.vmem [shape: f32[2,8,64], index: 0, kind: input, shape index: {}]
  %s1 = inlined_call_operand.vmem [shape: f32[64,384], index: 1, kind: input, shape index: {}]
  %s2 = inlined_call_operand.vmem [shape: f32[1,64], index: 2, kind: input, shape index: {}]
  %s3 = inlined_call_operand.hbm [shape: f32[2,8,64], index: 3, kind: output, shape index: {}]
  %s4 = sld [smem:[#allocation0]]
  $region22: #{multi_head_attention.1} parent=0
    _
  %s6 = ssub.s32 1, %s4
  %s7 = scalar_select 0, %s6, %s4
  $region1: #{multi_head_attention.1} parent=0
    #allocation2 [shape = 'u8[8192]{0}', space=vmem, size = 0x2000, scoped, tag = 'output window, operand 0, single buffered']
    #allocation3 [shape = 's32[1]{0}', space=sflag, size = 0x4, scoped, tag = 'scoped memory for multi_head_attention.1']
    %8 = vsyncpa [#allocation3], 0
    // Predicated region
    $region2: #{multi_head_attention.1} parent=1 // pred_check
      _
    $region3: #{multi_head_attention.1} parent=1 // pred_check_branch
      %10 = sbr.rel (0) target = $region5
    $region4: #{multi_head_attention.1} parent=1 // pred_region
      _
    $region5: #{multi_head_attention.1} parent=1 // pred_fallthru
      _
    // Predicated region
    $region6: #{multi_head_attention.1} parent=1 // pred_check
      _
    $region7: #{multi_head_attention.1} parent=1 // pred_check_branch
      %12 = sbr.rel (0) target = $region9
    $region8: #{multi_head_attention.1} parent=1 // pred_region
      _
    $region9: #{multi_head_attention.1} parent=1 // pred_fallthru
      _
    // Predicated region
    $region10: #{multi_head_attention.1} parent=1 // pred_check
      _
    $region11: #{multi_head_attention.1} parent=1 // pred_check_branch
      %14 = sbr.rel (0) target = $region13
    $region12: #{multi_head_attention.1} parent=1 // pred_region
      _
    $region13: #{multi_head_attention.1} parent=1 // pred_fallthru
      _
    %v15 = vld [vmem:[%s0] sm:$0xff]
    %v16 = vld [vmem:[%s0 + $0x8] sm:$0xff]
    %v17 = vld [vmem:[%s1] sm:$0xff]
    %v18 = vld [vmem:[%s1 + $0x8] sm:$0xff]
    %v19 = vld [vmem:[%s1 + $0x10] sm:$0xff]
    %v20 = vld [vmem:[%s1 + $0x18] sm:$0xff]
    %v21 = vld [vmem:[%s1 + $0x20] sm:$0xff]
    %v22 = vld [vmem:[%s1 + $0x28] sm:$0xff]
    %v23 = vld [vmem:[%s1 + $0x30] sm:$0xff]
    %v24 = vld [vmem:[%s1 + $0x38] sm:$0xff]
    %v25 = vld [vmem:[%s1 + $0x40] sm:$0xff]
    %v26 = vld [vmem:[%s1 + $0x48] sm:$0xff]
    %v27 = vld [vmem:[%s1 + $0x50] sm:$0xff]
    %v28 = vld [vmem:[%s1 + $0x58] sm:$0xff]
    %v29 = vld [vmem:[%s1 + $0x60] sm:$0xff]
    %v30 = vld [vmem:[%s1 + $0x68] sm:$0xff]
    %v31 = vld [vmem:[%s1 + $0x70] sm:$0xff]
    %v32 = vld [vmem:[%s1 + $0x78] sm:$0xff]
    %v33 = vld [vmem:[%s1 + $0x80] sm:$0xff]
    %v34 = vld [vmem:[%s1 + $0x88] sm:$0xff]
    %v35 = vld [vmem:[%s1 + $0x90] sm:$0xff]
    %v36 = vld [vmem:[%s1 + $0x98] sm:$0xff]
    %v37 = vld [vmem:[%s1 + $0xa0] sm:$0xff]
    %v38 = vld [vmem:[%s1 + $0xa8] sm:$0xff]
    %v39 = vld [vmem:[%s1 + $0xb0] sm:$0xff]
    %v40 = vld [vmem:[%s1 + $0xb8] sm:$0xff]
    %vm41 = vcmask 523264
    %v43 = vsel %vm41, %v15, 0
    %v46 = vsel %vm41, %v16, 0
    %48 = vmatpush.msra.mxu0 0.0
    %49 = vmatpush.msra.mxu0 0.0
    %50 = vmatpush.msra.mxu0 0.0
    %51 = vmatpush.msra.mxu0 0.0
    %52 = vmatpush.msra.mxu0 0.0
    %53 = vmatpush.msra.mxu0 0.0
    %54 = vmatpush.msra.mxu0 0.0
    %55 = vmatpush.msra.mxu0 0.0
    %56 = vmatpush.msra.mxu0 %v38
    %57 = vmatpush.msra.mxu0 %v35
    %58 = vmatpush.msra.mxu0 %v32
    %59 = vmatpush.msra.mxu0 %v29
    %60 = vmatpush.msra.mxu0 %v26
    %61 = vmatpush.msra.mxu0 %v23
    %62 = vmatpush.msra.mxu0 %v20
    %63 = vmatpush.msra.mxu0 %v17
    %64 = vmatmul.f32.gmra.mxu0 %v43
    %v65 = vpop.f32.mrf.mxu0
    %v66 = vadd.f32 0.0, %v65
    %67 = vmatmul.f32.gmra.mxu0 %v46
    %v68 = vpop.f32.mrf.mxu0
    %v69 = vadd.f32 0.0, %v68
    %70 = vdwg.mxu0
    %71 = vmatpush.msra.mxu0 0.0
    %72 = vmatpush.msra.mxu0 0.0
    %73 = vmatpush.msra.mxu0 0.0
    %74 = vmatpush.msra.mxu0 0.0
    %75 = vmatpush.msra.mxu0 0.0
    %76 = vmatpush.msra.mxu0 0.0
    %77 = vmatpush.msra.mxu0 0.0
    %78 = vmatpush.msra.mxu0 0.0
    %79 = vmatpush.msra.mxu0 %v39
    %80 = vmatpush.msra.mxu0 %v36
    %81 = vmatpush.msra.mxu0 %v33
    %82 = vmatpush.msra.mxu0 %v30
    %83 = vmatpush.msra.mxu0 %v27
    %84 = vmatpush.msra.mxu0 %v24
    %85 = vmatpush.msra.mxu0 %v21
    %86 = vmatpush.msra.mxu0 %v18
    %87 = vmatmul.f32.gmra.mxu0 %v43
    %v88 = vpop.f32.mrf.mxu0
    %v89 = vadd.f32 0.0, %v88
    %90 = vmatmul.f32.gmra.mxu0 %v46
    %v91 = vpop.f32.mrf.mxu0
    %v92 = vadd.f32 0.0, %v91
    %93 = vdwg.mxu0
    %94 = vmatpush.msra.mxu0 0.0
    %95 = vmatpush.msra.mxu0 0.0
    %96 = vmatpush.msra.mxu0 0.0
    %97 = vmatpush.msra.mxu0 0.0
    %98 = vmatpush.msra.mxu0 0.0
    %99 = vmatpush.msra.mxu0 0.0
    %100 = vmatpush.msra.mxu0 0.0
    %101 = vmatpush.msra.mxu0 0.0
    %102 = vmatpush.msra.mxu0 %v40
    %103 = vmatpush.msra.mxu0 %v37
    %104 = vmatpush.msra.mxu0 %v34
    %105 = vmatpush.msra.mxu0 %v31
    %106 = vmatpush.msra.mxu0 %v28
    %107 = vmatpush.msra.mxu0 %v25
    %108 = vmatpush.msra.mxu0 %v22
    %109 = vmatpush.msra.mxu0 %v19
    %110 = vmatmul.f32.gmra.mxu0 %v43
    %v111 = vpop.f32.mrf.mxu0
    %v112 = vadd.f32 0.0, %v111
    %113 = vmatmul.f32.gmra.mxu0 %v46
    %v114 = vpop.f32.mrf.mxu0
    %v115 = vadd.f32 0.0, %v114
    %116 = vdwg.mxu0
    %v117 = vlaneseq
    %v118 = vshrl.u32 %v117, 7
    %v119 = vlaneseq
    %v120 = vand.u32 %v119, 127
    %vm121 = vcmp.le.s32.totalorder %v120, %v118
    %v122 = vsel %vm121, 0.0, -1e+30
    %124 = vrot.lane.b32.xlu0 %v66, 64
    %v125 = vpop.permute.xlu0 %124
    %vm126 = vcmask 130048
    %v127 = vsel %vm126, %v66, 0
    %v129 = vsel %vm126, %v125, 0
    %131 = vmatpush.xpose.msra.mxu0 0.0
    %132 = vmatpush.xpose.msra.mxu0 0.0
    %133 = vmatpush.xpose.msra.mxu0 0.0
    %134 = vmatpush.xpose.msra.mxu0 0.0
    %135 = vmatpush.xpose.msra.mxu0 0.0
    %136 = vmatpush.xpose.msra.mxu0 0.0
    %137 = vmatpush.xpose.msra.mxu0 0.0
    %138 = vmatpush.xpose.msra.mxu0 0.0
    %139 = vmatpush.xpose.msra.mxu0 0.0
    %140 = vmatpush.xpose.msra.mxu0 0.0
    %141 = vmatpush.xpose.msra.mxu0 0.0
    %142 = vmatpush.xpose.msra.mxu0 0.0
    %143 = vmatpush.xpose.msra.mxu0 0.0
    %144 = vmatpush.xpose.msra.mxu0 0.0
    %145 = vmatpush.xpose.msra.mxu0 0.0
    %146 = vmatpush.xpose.msra.mxu0 %v129
    %147 = vmatmul.f32.gmra.mxu0 %v127
    %v148 = vpop.f32.mrf.mxu0
    %v149 = vadd.f32 %v122, %v148
    %150 = vdwg.mxu0
    %152 = vrot.lane.b32.xlu0 %v69, 64
    %v153 = vpop.permute.xlu0 %152
    %v154 = vsel %vm126, %v69, 0
    %v156 = vsel %vm126, %v153, 0
    %158 = vmatpush.xpose.msra.mxu0 0.0
    %159 = vmatpush.xpose.msra.mxu0 0.0
    %160 = vmatpush.xpose.msra.mxu0 0.0
    %161 = vmatpush.xpose.msra.mxu0 0.0
    %162 = vmatpush.xpose.msra.mxu0 0.0
    %163 = vmatpush.xpose.msra.mxu0 0.0
    %164 = vmatpush.xpose.msra.mxu0 0.0
    %165 = vmatpush.xpose.msra.mxu0 0.0
    %166 = vmatpush.xpose.msra.mxu0 0.0
    %167 = vmatpush.xpose.msra.mxu0 0.0
    %168 = vmatpush.xpose.msra.mxu0 0.0
    %169 = vmatpush.xpose.msra.mxu0 0.0
    %170 = vmatpush.xpose.msra.mxu0 0.0
    %171 = vmatpush.xpose.msra.mxu0 0.0
    %172 = vmatpush.xpose.msra.mxu0 0.0
    %173 = vmatpush.xpose.msra.mxu0 %v156
    %174 = vmatmul.f32.gmra.mxu0 %v154
    %v175 = vpop.f32.mrf.mxu0
    %v176 = vadd.f32 %v122, %v175
    %177 = vdwg.mxu0
    %vm178 = vcmask 64512
    %v179 = vsel %vm178, %v149, -inf
    %180 = vmax.xlane.f32.xlu0 %v179
    %v181 = vpop.xlane.xlu0 %180
    %v182 = vsel %vm178, %v176, -inf
    %183 = vmax.xlane.f32.xlu0 %v182
    %v184 = vpop.xlane.xlu0 %183
    %v185 = vsub.f32 %v149, %v181
    %v186 = vsub.f32 %v176, %v184
    %v187 = vmul.f32 %v185, 1.442695
    %v188 = vpow.pop %v187
    %v189 = vmul.f32 %v186, 1.442695
    %v190 = vpow.pop %v189
    %v191 = vsel %vm178, %v188, 0.0
    %192 = vadd.xlane.f32.xlu0 %v191
    %v193 = vpop.xlane.xlu0 %192
    %v194 = vsel %vm178, %v190, 0.0
    %195 = vadd.xlane.f32.xlu0 %v194
    %v196 = vpop.xlane.xlu0 %195
    %v197 = vrcp.pop %v193
    %v198 = vrcp.pop %v196
    %v199 = vmul.f32 %v188, %v197
    %v200 = vmul.f32 %v190, %v198
    %201 = vrot.lane.b32.xlu0 %v66, 112
    %v202 = vpop.permute.xlu0 %201
    %203 = vrot.lane.b32.xlu0 %v66, 48
    %v204 = vpop.permute.xlu0 %203
    %v205 = vsel %vm126, %v202, 0
    %v207 = vsel %vm126, %v204, 0
    %209 = vmatpush.xpose.msra.mxu0 0.0
    %210 = vmatpush.xpose.msra.mxu0 0.0
    %211 = vmatpush.xpose.msra.mxu0 0.0
    %212 = vmatpush.xpose.msra.mxu0 0.0
    %213 = vmatpush.xpose.msra.mxu0 0.0
    %214 = vmatpush.xpose.msra.mxu0 0.0
    %215 = vmatpush.xpose.msra.mxu0 0.0
    %216 = vmatpush.xpose.msra.mxu0 0.0
    %217 = vmatpush.xpose.msra.mxu0 0.0
    %218 = vmatpush.xpose.msra.mxu0 0.0
    %219 = vmatpush.xpose.msra.mxu0 0.0
    %220 = vmatpush.xpose.msra.mxu0 0.0
    %221 = vmatpush.xpose.msra.mxu0 0.0
    %222 = vmatpush.xpose.msra.mxu0 0.0
    %223 = vmatpush.xpose.msra.mxu0 0.0
    %224 = vmatpush.xpose.msra.mxu0 %v207
    %225 = vmatmul.f32.gmra.mxu0 %v205
    %v226 = vpop.f32.mrf.mxu0
    %v227 = vadd.f32 %v122, %v226
    %228 = vdwg.mxu0
    %229 = vrot.lane.b32.xlu0 %v69, 112
    %v230 = vpop.permute.xlu0 %229
    %231 = vrot.lane.b32.xlu0 %v69, 48
    %v232 = vpop.permute.xlu0 %231
    %v233 = vsel %vm126, %v230, 0
    %v235 = vsel %vm126, %v232, 0
    %237 = vmatpush.xpose.msra.mxu0 0.0
    %238 = vmatpush.xpose.msra.mxu0 0.0
    %239 = vmatpush.xpose.msra.mxu0 0.0
    %240 = vmatpush.xpose.msra.mxu0 0.0
    %241 = vmatpush.xpose.msra.mxu0 0.0
    %242 = vmatpush.xpose.msra.mxu0 0.0
    %243 = vmatpush.xpose.msra.mxu0 0.0
    %244 = vmatpush.xpose.msra.mxu0 0.0
    %245 = vmatpush.xpose.msra.mxu0 0.0
    %246 = vmatpush.xpose.msra.mxu0 0.0
    %247 = vmatpush.xpose.msra.mxu0 0.0
    %248 = vmatpush.xpose.msra.mxu0 0.0
    %249 = vmatpush.xpose.msra.mxu0 0.0
    %250 = vmatpush.xpose.msra.mxu0 0.0
    %251 = vmatpush.xpose.msra.mxu0 0.0
    %252 = vmatpush.xpose.msra.mxu0 %v235
    %253 = vmatmul.f32.gmra.mxu0 %v233
    %v254 = vpop.f32.mrf.mxu0
    %v255 = vadd.f32 %v122, %v254
    %256 = vdwg.mxu0
    %v257 = vsel %vm178, %v227, -inf
    %258 = vmax.xlane.f32.xlu0 %v257
    %v259 = vpop.xlane.xlu0 %258
    %v260 = vsel %vm178, %v255, -inf
    %261 = vmax.xlane.f32.xlu0 %v260
    %v262 = vpop.xlane.xlu0 %261
    %v263 = vsub.f32 %v227, %v259
    %v264 = vsub.f32 %v255, %v262
    %v265 = vmul.f32 %v263, 1.442695
    %v266 = vpow.pop %v265
    %v267 = vmul.f32 %v264, 1.442695
    %v268 = vpow.pop %v267
    %v269 = vsel %vm178, %v266, 0.0
    %270 = vadd.xlane.f32.xlu0 %v269
    %v271 = vpop.xlane.xlu0 %270
    %v272 = vsel %vm178, %v268, 0.0
    %273 = vadd.xlane.f32.xlu0 %v272
    %v274 = vpop.xlane.xlu0 %273
    %v275 = vrcp.pop %v271
    %v276 = vrcp.pop %v274
    %v277 = vmul.f32 %v266, %v275
    %v278 = vmul.f32 %v268, %v276
    %280 = vrot.lane.b32.xlu0 %v89, 64
    %v281 = vpop.permute.xlu0 %280
    %v284 = vsel %vm178, %v277, 0
    %286 = vmatpush.msra.mxu0 0.0
    %287 = vmatpush.msra.mxu0 0.0
    %288 = vmatpush.msra.mxu0 0.0
    %289 = vmatpush.msra.mxu0 0.0
    %290 = vmatpush.msra.mxu0 0.0
    %291 = vmatpush.msra.mxu0 0.0
    %292 = vmatpush.msra.mxu0 0.0
    %293 = vmatpush.msra.mxu0 0.0
    %294 = vmatpush.msra.mxu0 0.0
    %295 = vmatpush.msra.mxu0 0.0
    %296 = vmatpush.msra.mxu0 0.0
    %297 = vmatpush.msra.mxu0 0.0
    %298 = vmatpush.msra.mxu0 0.0
    %299 = vmatpush.msra.mxu0 0.0
    %300 = vmatpush.msra.mxu0 0.0
    %301 = vmatpush.msra.mxu0 %v281
    %302 = vmatmul.f32.gmra.mxu0 %v284
    %v303 = vpop.f32.mrf.mxu0
    %v304 = vadd.f32 0.0, %v303
    %305 = vdwg.mxu0
    %307 = vrot.lane.b32.xlu0 %v92, 64
    %v308 = vpop.permute.xlu0 %307
    %v311 = vsel %vm178, %v278, 0
    %313 = vmatpush.msra.mxu0 0.0
    %314 = vmatpush.msra.mxu0 0.0
    %315 = vmatpush.msra.mxu0 0.0
    %316 = vmatpush.msra.mxu0 0.0
    %317 = vmatpush.msra.mxu0 0.0
    %318 = vmatpush.msra.mxu0 0.0
    %319 = vmatpush.msra.mxu0 0.0
    %320 = vmatpush.msra.mxu0 0.0
    %321 = vmatpush.msra.mxu0 0.0
    %322 = vmatpush.msra.mxu0 0.0
    %323 = vmatpush.msra.mxu0 0.0
    %324 = vmatpush.msra.mxu0 0.0
    %325 = vmatpush.msra.mxu0 0.0
    %326 = vmatpush.msra.mxu0 0.0
    %327 = vmatpush.msra.mxu0 0.0
    %328 = vmatpush.msra.mxu0 %v308
    %329 = vmatmul.f32.gmra.mxu0 %v311
    %v330 = vpop.f32.mrf.mxu0
    %v331 = vadd.f32 0.0, %v330
    %332 = vdwg.mxu0
    %v334 = vsel %vm178, %v199, 0
    %336 = vmatpush.msra.mxu0 0.0
    %337 = vmatpush.msra.mxu0 0.0
    %338 = vmatpush.msra.mxu0 0.0
    %339 = vmatpush.msra.mxu0 0.0
    %340 = vmatpush.msra.mxu0 0.0
    %341 = vmatpush.msra.mxu0 0.0
    %342 = vmatpush.msra.mxu0 0.0
    %343 = vmatpush.msra.mxu0 0.0
    %344 = vmatpush.msra.mxu0 0.0
    %345 = vmatpush.msra.mxu0 0.0
    %346 = vmatpush.msra.mxu0 0.0
    %347 = vmatpush.msra.mxu0 0.0
    %348 = vmatpush.msra.mxu0 0.0
    %349 = vmatpush.msra.mxu0 0.0
    %350 = vmatpush.msra.mxu0 0.0
    %351 = vmatpush.msra.mxu0 %v89
    %352 = vmatmul.f32.gmra.mxu0 %v334
    %v353 = vpop.f32.mrf.mxu0
    %v354 = vadd.f32 %v304, %v353
    %355 = vdwg.mxu0
    %v357 = vsel %vm178, %v200, 0
    %359 = vmatpush.msra.mxu0 0.0
    %360 = vmatpush.msra.mxu0 0.0
    %361 = vmatpush.msra.mxu0 0.0
    %362 = vmatpush.msra.mxu0 0.0
    %363 = vmatpush.msra.mxu0 0.0
    %364 = vmatpush.msra.mxu0 0.0
    %365 = vmatpush.msra.mxu0 0.0
    %366 = vmatpush.msra.mxu0 0.0
    %367 = vmatpush.msra.mxu0 0.0
    %368 = vmatpush.msra.mxu0 0.0
    %369 = vmatpush.msra.mxu0 0.0
    %370 = vmatpush.msra.mxu0 0.0
    %371 = vmatpush.msra.mxu0 0.0
    %372 = vmatpush.msra.mxu0 0.0
    %373 = vmatpush.msra.mxu0 0.0
    %374 = vmatpush.msra.mxu0 %v92
    %375 = vmatmul.f32.gmra.mxu0 %v357
    %v376 = vpop.f32.mrf.mxu0
    %v377 = vadd.f32 %v331, %v376
    %378 = vdwg.mxu0
    %379 = vrot.lane.b32.xlu0 %v66, 96
    %v380 = vpop.permute.xlu0 %379
    %381 = vrot.lane.b32.xlu0 %v66, 32
    %v382 = vpop.permute.xlu0 %381
    %v383 = vsel %vm126, %v380, 0
    %v385 = vsel %vm126, %v382, 0
    %387 = vmatpush.xpose.msra.mxu0 0.0
    %388 = vmatpush.xpose.msra.mxu0 0.0
    %389 = vmatpush.xpose.msra.mxu0 0.0
    %390 = vmatpush.xpose.msra.mxu0 0.0
    %391 = vmatpush.xpose.msra.mxu0 0.0
    %392 = vmatpush.xpose.msra.mxu0 0.0
    %393 = vmatpush.xpose.msra.mxu0 0.0
    %394 = vmatpush.xpose.msra.mxu0 0.0
    %395 = vmatpush.xpose.msra.mxu0 0.0
    %396 = vmatpush.xpose.msra.mxu0 0.0
    %397 = vmatpush.xpose.msra.mxu0 0.0
    %398 = vmatpush.xpose.msra.mxu0 0.0
    %399 = vmatpush.xpose.msra.mxu0 0.0
    %400 = vmatpush.xpose.msra.mxu0 0.0
    %401 = vmatpush.xpose.msra.mxu0 0.0
    %402 = vmatpush.xpose.msra.mxu0 %v385
    %403 = vmatmul.f32.gmra.mxu0 %v383
    %v404 = vpop.f32.mrf.mxu0
    %v405 = vadd.f32 %v122, %v404
    %406 = vdwg.mxu0
    %407 = vrot.lane.b32.xlu0 %v69, 96
    %v408 = vpop.permute.xlu0 %407
    %409 = vrot.lane.b32.xlu0 %v69, 32
    %v410 = vpop.permute.xlu0 %409
    %v411 = vsel %vm126, %v408, 0
    %v413 = vsel %vm126, %v410, 0
    %415 = vmatpush.xpose.msra.mxu0 0.0
    %416 = vmatpush.xpose.msra.mxu0 0.0
    %417 = vmatpush.xpose.msra.mxu0 0.0
    %418 = vmatpush.xpose.msra.mxu0 0.0
    %419 = vmatpush.xpose.msra.mxu0 0.0
    %420 = vmatpush.xpose.msra.mxu0 0.0
    %421 = vmatpush.xpose.msra.mxu0 0.0
    %422 = vmatpush.xpose.msra.mxu0 0.0
    %423 = vmatpush.xpose.msra.mxu0 0.0
    %424 = vmatpush.xpose.msra.mxu0 0.0
    %425 = vmatpush.xpose.msra.mxu0 0.0
    %426 = vmatpush.xpose.msra.mxu0 0.0
    %427 = vmatpush.xpose.msra.mxu0 0.0
    %428 = vmatpush.xpose.msra.mxu0 0.0
    %429 = vmatpush.xpose.msra.mxu0 0.0
    %430 = vmatpush.xpose.msra.mxu0 %v413
    %431 = vmatmul.f32.gmra.mxu0 %v411
    %v432 = vpop.f32.mrf.mxu0
    %v433 = vadd.f32 %v122, %v432
    %434 = vdwg.mxu0
    %v435 = vsel %vm178, %v405, -inf
    %436 = vmax.xlane.f32.xlu0 %v435
    %v437 = vpop.xlane.xlu0 %436
    %v438 = vsel %vm178, %v433, -inf
    %439 = vmax.xlane.f32.xlu0 %v438
    %v440 = vpop.xlane.xlu0 %439
    %v441 = vsub.f32 %v405, %v437
    %v442 = vsub.f32 %v433, %v440
    %v443 = vmul.f32 %v441, 1.442695
    %v444 = vpow.pop %v443
    %v445 = vmul.f32 %v442, 1.442695
    %v446 = vpow.pop %v445
    %v447 = vsel %vm178, %v444, 0.0
    %448 = vadd.xlane.f32.xlu0 %v447
    %v449 = vpop.xlane.xlu0 %448
    %v450 = vsel %vm178, %v446, 0.0
    %451 = vadd.xlane.f32.xlu0 %v450
    %v452 = vpop.xlane.xlu0 %451
    %v453 = vrcp.pop %v449
    %v454 = vrcp.pop %v452
    %v455 = vmul.f32 %v444, %v453
    %v456 = vmul.f32 %v446, %v454
    %v458 = vsel %vm178, %v455, 0
    %460 = vmatpush.msra.mxu0 0.0
    %461 = vmatpush.msra.mxu0 0.0
    %462 = vmatpush.msra.mxu0 0.0
    %463 = vmatpush.msra.mxu0 0.0
    %464 = vmatpush.msra.mxu0 0.0
    %465 = vmatpush.msra.mxu0 0.0
    %466 = vmatpush.msra.mxu0 0.0
    %467 = vmatpush.msra.mxu0 0.0
    %468 = vmatpush.msra.mxu0 0.0
    %469 = vmatpush.msra.mxu0 0.0
    %470 = vmatpush.msra.mxu0 0.0
    %471 = vmatpush.msra.mxu0 0.0
    %472 = vmatpush.msra.mxu0 0.0
    %473 = vmatpush.msra.mxu0 0.0
    %474 = vmatpush.msra.mxu0 0.0
    %475 = vmatpush.msra.mxu0 %v112
    %476 = vmatmul.f32.gmra.mxu0 %v458
    %v477 = vpop.f32.mrf.mxu0
    %v478 = vadd.f32 0.0, %v477
    %479 = vdwg.mxu0
    %v481 = vsel %vm178, %v456, 0
    %483 = vmatpush.msra.mxu0 0.0
    %484 = vmatpush.msra.mxu0 0.0
    %485 = vmatpush.msra.mxu0 0.0
    %486 = vmatpush.msra.mxu0 0.0
    %487 = vmatpush.msra.mxu0 0.0
    %488 = vmatpush.msra.mxu0 0.0
    %489 = vmatpush.msra.mxu0 0.0
    %490 = vmatpush.msra.mxu0 0.0
    %491 = vmatpush.msra.mxu0 0.0
    %492 = vmatpush.msra.mxu0 0.0
    %493 = vmatpush.msra.mxu0 0.0
    %494 = vmatpush.msra.mxu0 0.0
    %495 = vmatpush.msra.mxu0 0.0
    %496 = vmatpush.msra.mxu0 0.0
    %497 = vmatpush.msra.mxu0 0.0
    %498 = vmatpush.msra.mxu0 %v115
    %499 = vmatmul.f32.gmra.mxu0 %v481
    %v500 = vpop.f32.mrf.mxu0
    %v501 = vadd.f32 0.0, %v500
    %502 = vdwg.mxu0
    %v503 = vadd.f32 %v354, %v478
    %v504 = vadd.f32 %v377, %v501
    %505 = vrot.lane.b32.xlu0 %v66, 80
    %v506 = vpop.permute.xlu0 %505
    %507 = vrot.lane.b32.xlu0 %v66, 16
    %v508 = vpop.permute.xlu0 %507
    %v509 = vsel %vm126, %v506, 0
    %v511 = vsel %vm126, %v508, 0
    %513 = vmatpush.xpose.msra.mxu0 0.0
    %514 = vmatpush.xpose.msra.mxu0 0.0
    %515 = vmatpush.xpose.msra.mxu0 0.0
    %516 = vmatpush.xpose.msra.mxu0 0.0
    %517 = vmatpush.xpose.msra.mxu0 0.0
    %518 = vmatpush.xpose.msra.mxu0 0.0
    %519 = vmatpush.xpose.msra.mxu0 0.0
    %520 = vmatpush.xpose.msra.mxu0 0.0
    %521 = vmatpush.xpose.msra.mxu0 0.0
    %522 = vmatpush.xpose.msra.mxu0 0.0
    %523 = vmatpush.xpose.msra.mxu0 0.0
    %524 = vmatpush.xpose.msra.mxu0 0.0
    %525 = vmatpush.xpose.msra.mxu0 0.0
    %526 = vmatpush.xpose.msra.mxu0 0.0
    %527 = vmatpush.xpose.msra.mxu0 0.0
    %528 = vmatpush.xpose.msra.mxu0 %v511
    %529 = vmatmul.f32.gmra.mxu0 %v509
    %v530 = vpop.f32.mrf.mxu0
    %v531 = vadd.f32 %v122, %v530
    %532 = vdwg.mxu0
    %533 = vrot.lane.b32.xlu0 %v69, 80
    %v534 = vpop.permute.xlu0 %533
    %535 = vrot.lane.b32.xlu0 %v69, 16
    %v536 = vpop.permute.xlu0 %535
    %v537 = vsel %vm126, %v534, 0
    %v539 = vsel %vm126, %v536, 0
    %541 = vmatpush.xpose.msra.mxu0 0.0
    %542 = vmatpush.xpose.msra.mxu0 0.0
    %543 = vmatpush.xpose.msra.mxu0 0.0
    %544 = vmatpush.xpose.msra.mxu0 0.0
    %545 = vmatpush.xpose.msra.mxu0 0.0
    %546 = vmatpush.xpose.msra.mxu0 0.0
    %547 = vmatpush.xpose.msra.mxu0 0.0
    %548 = vmatpush.xpose.msra.mxu0 0.0
    %549 = vmatpush.xpose.msra.mxu0 0.0
    %550 = vmatpush.xpose.msra.mxu0 0.0
    %551 = vmatpush.xpose.msra.mxu0 0.0
    %552 = vmatpush.xpose.msra.mxu0 0.0
    %553 = vmatpush.xpose.msra.mxu0 0.0
    %554 = vmatpush.xpose.msra.mxu0 0.0
    %555 = vmatpush.xpose.msra.mxu0 0.0
    %556 = vmatpush.xpose.msra.mxu0 %v539
    %557 = vmatmul.f32.gmra.mxu0 %v537
    %v558 = vpop.f32.mrf.mxu0
    %v559 = vadd.f32 %v122, %v558
    %560 = vdwg.mxu0
    %v561 = vsel %vm178, %v531, -inf
    %562 = vmax.xlane.f32.xlu0 %v561
    %v563 = vpop.xlane.xlu0 %562
    %v564 = vsel %vm178, %v559, -inf
    %565 = vmax.xlane.f32.xlu0 %v564
    %v566 = vpop.xlane.xlu0 %565
    %v567 = vsub.f32 %v531, %v563
    %v568 = vsub.f32 %v559, %v566
    %v569 = vmul.f32 %v567, 1.442695
    %v570 = vpow.pop %v569
    %v571 = vmul.f32 %v568, 1.442695
    %v572 = vpow.pop %v571
    %v573 = vsel %vm178, %v570, 0.0
    %574 = vadd.xlane.f32.xlu0 %v573
    %v575 = vpop.xlane.xlu0 %574
    %v576 = vsel %vm178, %v572, 0.0
    %577 = vadd.xlane.f32.xlu0 %v576
    %v578 = vpop.xlane.xlu0 %577
    %v579 = vrcp.pop %v575
    %v580 = vrcp.pop %v578
    %v581 = vmul.f32 %v570, %v579
    %v582 = vmul.f32 %v572, %v580
    %584 = vrot.lane.b32.xlu0 %v112, 64
    %v585 = vpop.permute.xlu0 %584
    %v588 = vsel %vm178, %v581, 0
    %590 = vmatpush.msra.mxu0 0.0
    %591 = vmatpush.msra.mxu0 0.0
    %592 = vmatpush.msra.mxu0 0.0
    %593 = vmatpush.msra.mxu0 0.0
    %594 = vmatpush.msra.mxu0 0.0
    %595 = vmatpush.msra.mxu0 0.0
    %596 = vmatpush.msra.mxu0 0.0
    %597 = vmatpush.msra.mxu0 0.0
    %598 = vmatpush.msra.mxu0 0.0
    %599 = vmatpush.msra.mxu0 0.0
    %600 = vmatpush.msra.mxu0 0.0
    %601 = vmatpush.msra.mxu0 0.0
    %602 = vmatpush.msra.mxu0 0.0
    %603 = vmatpush.msra.mxu0 0.0
    %604 = vmatpush.msra.mxu0 0.0
    %605 = vmatpush.msra.mxu0 %v585
    %606 = vmatmul.f32.gmra.mxu0 %v588
    %v607 = vpop.f32.mrf.mxu0
    %v608 = vadd.f32 0.0, %v607
    %609 = vdwg.mxu0
    %611 = vrot.lane.b32.xlu0 %v115, 64
    %v612 = vpop.permute.xlu0 %611
    %v615 = vsel %vm178, %v582, 0
    %617 = vmatpush.msra.mxu0 0.0
    %618 = vmatpush.msra.mxu0 0.0
    %619 = vmatpush.msra.mxu0 0.0
    %620 = vmatpush.msra.mxu0 0.0
    %621 = vmatpush.msra.mxu0 0.0
    %622 = vmatpush.msra.mxu0 0.0
    %623 = vmatpush.msra.mxu0 0.0
    %624 = vmatpush.msra.mxu0 0.0
    %625 = vmatpush.msra.mxu0 0.0
    %626 = vmatpush.msra.mxu0 0.0
    %627 = vmatpush.msra.mxu0 0.0
    %628 = vmatpush.msra.mxu0 0.0
    %629 = vmatpush.msra.mxu0 0.0
    %630 = vmatpush.msra.mxu0 0.0
    %631 = vmatpush.msra.mxu0 0.0
    %632 = vmatpush.msra.mxu0 %v612
    %633 = vmatmul.f32.gmra.mxu0 %v615
    %v634 = vpop.f32.mrf.mxu0
    %v635 = vadd.f32 0.0, %v634
    %636 = vdwg.mxu0
    %v637 = vadd.f32 %v503, %v608
    %v638 = vadd.f32 %v504, %v635
    %v639 = vld [vmem:[%s2] sm:$0x1]
    %v641 = vperm.slane %v639, 0
    %v643 = vadd.f32 %v637, %v641
    %v644 = vadd.f32 %v638, %v641
    %645 = vst.msk [vmem:[#allocation2] sm:$0xff] %vm41, %v643
    %646 = vst.msk [vmem:[#allocation2 + $0x8] sm:$0xff] %vm41, %v644
    // Predicated region
    $region14: #{multi_head_attention.1} parent=1 // pred_check
      _
    $region15: #{multi_head_attention.1} parent=1 // pred_check_branch
      %648 = sbr.rel (0) target = $region17
    $region16: #{multi_head_attention.1} parent=1 // pred_region
      %650 = vsyncadd [#allocation3], 0
      %s651 = sshll.u32 [#allocation2], 4
      %s652 = int_to_ptr.vmem [resolvable:$true] %s651
      %s653 = sshll.u32 %s3, 4
      %s654 = int_to_ptr.hbm [resolvable:$true] %s653
      %659 = dma.vmem_to_hbm [thread:$0]  %s652, 256, %s654, [#allocation3], 128, 128, 8
    $region17: #{multi_head_attention.1} parent=1 // pred_fallthru
      _
    // Predicated region
    $region18: #{multi_head_attention.1} parent=1 // pred_check
      _
    $region19: #{multi_head_attention.1} parent=1 // pred_check_branch
      %661 = sbr.rel (0) target = $region21
    $region20: #{multi_head_attention.1} parent=1 // pred_region
      %663 = dma.done [#allocation3], 256
    $region21: #{multi_head_attention.1} parent=1 // pred_fallthru
      _
    %664 = vsyncpa [#allocation3], 1

</llo_original>
